<compile_context>
chip_gen: v7x
topology: tpu7x:2x2x1
jax: 0.10.0
libtpu: 0.0.40
codegen_flags: <defaults>
</compile_context>

<pallas_src>
import functools

import numpy as np

import jax
import jax.numpy as jnp
from jax import lax
from jax.experimental import pallas as pl
from jax.experimental.pallas import tpu as pltpu


def _round_up(v, m):
    return ((v + m - 1) // m) * m


# ----------------------------------------------------------------------------
# Static layout of one residual block (all Python ints, resolved at trace time)
# ----------------------------------------------------------------------------
def _block_layout(h, w, cin, cout, k, s):
    p = k // 2
    ho = (h + 2 * p - k) // s + 1
    wo = (w + 2 * p - k) // s + 1
    e1 = (k - 1) // s                       # extra decimated rows/cols conv1 touches
    # One padded row width Q shared by conv1's decimated input, the intermediate
    # (conv2's padded input) and the conv2 / shortcut output row layout, so conv1's
    # output can be dropped directly into conv2's input layout inside VMEM.
    q = _round_up(max(wo + e1, -(-(w + p) // s), wo + (k - 1)), 8)
    qh1 = max(ho + e1, -(-(h + p) // s))    # decimated padded height (per phase)
    qh2 = ho + k                            # intermediate padded height
    cin_pad = _round_up(cin, 8)

    offs1 = []
    for ky in range(k):
        for kx in range(k):
            ph = (ky % s) * s + (kx % s)
            offs1.append(ph * qh1 * q + (ky // s) * q + (kx // s))
    offs2 = [ky * q + kx for ky in range(k) for kx in range(k)]

    r1 = (ho - 1) * q + wo                  # conv1 rows computed (incl. wrap junk cols)
    r2 = ho * q                             # conv2 / output rows (junk cols sliced off)
    h_start = p * q + p                     # conv1 output offset inside the padded
                                            # intermediate (zero halo of width p)
    sc_ph = (p % s) * s + (p % s)
    sc_start = sc_ph * qh1 * q + (p // s) * q + (p // s)   # stride-s 1x1 / identity tap
    xr = s * s * qh1 * q

    # trace-time bound checks for the static window arithmetic
    assert max(offs1) + r1 <= xr
    assert sc_start + r2 <= xr
    assert max(offs2) + r2 <= qh2 * q
    assert h_start + r1 <= qh2 * q
    return dict(p=p, ho=ho, wo=wo, q=q, qh1=qh1, qh2=qh2, cin_pad=cin_pad,
                offs1=tuple(offs1), offs2=tuple(offs2), r1=r1, r2=r2,
                h_start=h_start, sc_start=sc_start, xr=xr, cout=cout, k=k, s=s)


# ----------------------------------------------------------------------------
# Fused kernel: conv1+BN1+ReLU -> (VMEM) -> conv2+BN2 + shortcut + add + ReLU
# ----------------------------------------------------------------------------
def _residual_block_kernel(*refs, lay, proj):
    offs1, offs2 = lay["offs1"], lay["offs2"]
    r1, r2 = lay["r1"], lay["r2"]
    h_start, sc_start, cout = lay["h_start"], lay["sc_start"], lay["cout"]

    if proj:
        x_ref, w1_ref, b1_ref, w2_ref, b2_ref, m1_ref, wsc_ref, o_ref, h_ref = refs
    else:
        x_ref, w1_ref, b1_ref, w2_ref, b2_ref, m1_ref, o_ref, h_ref = refs
        wsc_ref = None

    # ---- conv1 + BN1 + ReLU : ONE MXU matmul ------------------------------------
    # im2col patches = k*k statically-offset lane windows of the resident activation,
    # stacked along the reduction axis (K = k*k*cin_pad).  Spatial rows are on lanes.
    p1 = jnp.concatenate([x_ref[0, :, off:off + r1] for off in offs1], axis=0)
    y1 = jnp.dot(w1_ref[...], p1, preferred_element_type=jnp.float32) + b1_ref[...]
    y1 = jnp.maximum(y1, 0.0)
    # zero the row-wrap junk columns so they act as conv2's zero padding
    y1 = y1 * m1_ref[...]

    # drop conv1's output straight into conv2's padded layout (intermediate never
    # leaves VMEM -- the previous version's HBM relayout round trip is gone)
    h_ref[...] = jnp.zeros(h_ref.shape, h_ref.dtype)
    h_ref[:, h_start:h_start + r1] = y1

    # ---- conv2 + BN2 + shortcut + residual add + ReLU ---------------------------
    p2 = jnp.concatenate([h_ref[:, off:off + r2] for off in offs2], axis=0)
    acc = jnp.dot(w2_ref[...], p2, preferred_element_type=jnp.float32) + b2_ref[...]

    if proj:
        # fused 1x1 stride-s projection shortcut (BN shift already folded into b2)
        xs = x_ref[0, :, sc_start:sc_start + r2]
        acc = acc + jnp.dot(wsc_ref[...], xs, preferred_element_type=jnp.float32)
    else:
        # identity residual, exact f32 add (review correctness concern)
        acc = acc + x_ref[0, :cout, sc_start:sc_start + r2]

    o_ref[0] = jnp.maximum(acc, 0.0).astype(o_ref.dtype)


# ----------------------------------------------------------------------------
# VMEM budget: Mosaic-tile-padded estimate + generation-aware cap
# ----------------------------------------------------------------------------
def _vmem_bytes(shape, dtype=jnp.float32):
    itemsize = jnp.dtype(dtype).itemsize
    sub = {4: 8, 2: 16, 1: 32}.get(itemsize, 8)
    dims = [int(d) for d in shape]
    if dims:
        dims[-1] = _round_up(dims[-1], 128)       # lane dim
    if len(dims) >= 2:
        dims[-2] = _round_up(dims[-2], sub)       # sublane dim
    n = itemsize
    for d in dims:
        n *= d
    return n


def _vmem_limit(block_shapes, scratch_shapes, temp_shapes):
    need = 2 * sum(_vmem_bytes(s) for s in block_shapes)        # double-buffered blocks
    need += sum(_vmem_bytes(s) for s in scratch_shapes)
    need += sum(_vmem_bytes(s) for s in temp_shapes)            # in-kernel temporaries
    try:
        phys = int(pltpu.get_tpu_info().vmem_capacity_bytes)
    except Exception:
        phys = 64 * 2**20
    cap = (96 if phys >= 100 * 2**20 else 40) * 2**20           # 96 MiB v5e/v6e, 40 v7x
    return int(min(cap, max(32 * 2**20, 2 * need)))


# ----------------------------------------------------------------------------
# FlexibleResidualBlock forward: ONE fused pallas_call per block
# ----------------------------------------------------------------------------
def flexible_residual_block_forward(params, x_nchw, *, kernel, stride):
    k, s = int(kernel), int(stride)
    n, cin, h, w = x_nchw.shape
    cout = int(params["w1"].shape[-1])
    proj = (s != 1) or (cin != cout)
    if proj:
        assert "wsc" in params, "projection shortcut parameters missing"

    lay = _block_layout(h, w, cin, cout, k, s)
    p, q, qh1, qh2 = lay["p"], lay["q"], lay["qh1"], lay["qh2"]
    cin_pad, xr, r1, r2 = lay["cin_pad"], lay["xr"], lay["r1"], lay["r2"]

    # ---- wrapper relayout: channel pad + spatial pad + space-to-depth (one pass) ----
    x = x_nchw.astype(jnp.float32)
    pad_b = s * qh1 - h - p
    pad_r = s * q - w - p
    xp = jnp.pad(x, ((0, 0), (0, cin_pad - cin), (p, pad_b), (p, pad_r)))
    xp = xp.reshape(n, cin_pad, qh1, s, q, s).transpose(0, 1, 3, 5, 2, 4)
    xflat = xp.reshape(n, cin_pad, xr)                     # [N, Cin_pad, XR]

    # ---- BN-folded weights in matmul form: [cout, k*k*cin] --------------------------
    def as_mat(w_hwio, kin_pad):
        kk = int(w_hwio.shape[0]) * int(w_hwio.shape[1])
        kin = int(w_hwio.shape[2])
        wp = jnp.pad(w_hwio, ((0, 0), (0, 0), (0, kin_pad - kin), (0, 0)))
        return wp.reshape(kk * kin_pad, cout).T.astype(jnp.float32)

    w1m = as_mat(params["w1"], cin_pad)                    # [cout, k*k*cin_pad]
    w2m = as_mat(params["w2"], cout)                       # [cout, k*k*cout]
    b1 = params["b1"].reshape(cout, 1).astype(jnp.float32)
    b2t = params["b2"] + params["bsc"] if proj else params["b2"]
    b2t = b2t.reshape(cout, 1).astype(jnp.float32)

    # static 0/1 mask that zeroes conv1's row-wrap junk columns (conv2 padding region)
    col = np.arange(r1) % q
    mask1 = jnp.asarray((col < lay["wo"]).astype(np.float32).reshape(1, r1))

    args = [xflat, w1m, b1, w2m, b2t, mask1]
    in_specs = [
        pl.BlockSpec((1, cin_pad, xr), lambda i: (i, 0, 0)),     # activation slab
        pl.BlockSpec(w1m.shape, lambda i: (0, 0)),
        pl.BlockSpec((cout, 1), lambda i: (0, 0)),
        pl.BlockSpec(w2m.shape, lambda i: (0, 0)),
        pl.BlockSpec((cout, 1), lambda i: (0, 0)),
        pl.BlockSpec((1, r1), lambda i: (0, 0)),
    ]
    if proj:
        wscm = as_mat(params["wsc"], cin_pad)                    # [cout, cin_pad]
        args.append(wscm)
        in_specs.append(pl.BlockSpec(wscm.shape, lambda i: (0, 0)))

    block_shapes = [(1, cin_pad, xr), w1m.shape, (cout, 1), w2m.shape, (cout, 1),
                    (1, r1), (1, cout, r2)]
    if proj:
        block_shapes.append((cout, cin_pad))
    temp_shapes = [(k * k * cin_pad, r1), (k * k * cout, r2), (cout, r2), (cout, r2)]
    vmem_limit = _vmem_limit(block_shapes, [(cout, qh2 * q)], temp_shapes)

    out = pl.pallas_call(
        functools.partial(_residual_block_kernel, lay=lay, proj=proj),
        out_shape=jax.ShapeDtypeStruct((n, cout, r2), jnp.float32),
        grid=(n,),
        in_specs=in_specs,
        out_specs=pl.BlockSpec((1, cout, r2), lambda i: (i, 0, 0)),
        scratch_shapes=[pltpu.VMEM((cout, qh2 * q), jnp.float32)],
        compiler_params=pltpu.CompilerParams(
            dimension_semantics=("parallel",),       # batch axis -> 2 TCs on v7x
            vmem_limit_bytes=vmem_limit),
    )(*args)

    # kernel output is lane-dense [N, cout, ho*Q]; drop the junk columns -> NCHW
    out = out.reshape(n, cout, lay["ho"], q)[:, :, :, :lay["wo"]]
    return out


# ----------------------------------------------------------------------------
# Deterministic synthetic parameters (Conv2d bias=True + BatchNorm, folded)
# ----------------------------------------------------------------------------
def _make_conv_bn_params(key, k, cin, cout):
    k1, k2, k3, k4, k5, k6 = jax.random.split(key, 6)
    w = jax.random.normal(k1, (k, k, cin, cout), jnp.float32) * jnp.sqrt(2.0 / (k * k * cin))
    conv_b = 0.05 * jax.random.normal(k2, (cout,), jnp.float32)
    gamma = 1.0 + 0.1 * jax.random.normal(k3, (cout,), jnp.float32)
    beta = 0.1 * jax.random.normal(k4, (cout,), jnp.float32)
    rmean = 0.1 * jax.random.normal(k5, (cout,), jnp.float32)
    rvar = 1.0 + 0.1 * jax.random.uniform(k6, (cout,), jnp.float32)
    scale = gamma / jnp.sqrt(rvar + 1e-5)
    w_folded = w * scale[None, None, None, :]
    b_folded = beta + (conv_b - rmean) * scale
    return w_folded, b_folded


# ----------------------------------------------------------------------------
# Pure-JAX reference (f32) for validation
# ----------------------------------------------------------------------------
def reference_block(params, x_nchw, *, kernel, stride):
    k, s, p = kernel, stride, kernel // 2
    x = x_nchw.astype(jnp.float32)

    def conv(inp, w_hwio, b, st, pad):
        y = lax.conv_general_dilated(inp, w_hwio, (st, st), ((pad, pad), (pad, pad)),
                                     dimension_numbers=("NCHW", "HWIO", "NCHW"))
        return y + b[None, :, None, None]

    hmid = jax.nn.relu(conv(x, params["w1"], params["b1"], s, p))
    left = conv(hmid, params["w2"], params["b2"], 1, p)
    sc = conv(x, params["wsc"], params["bsc"], s, 0) if "wsc" in params else x
    return jax.nn.relu(left + sc)


if __name__ == "__main__":
    key = jax.random.PRNGKey(0)
    keys = jax.random.split(key, 10)

    def check(name, params, x, kernel, stride, out_hw):
        fwd = jax.jit(functools.partial(flexible_residual_block_forward,
                                        kernel=kernel, stride=stride))
        out = fwd(params, x)
        jax.block_until_ready(out)
        ref = reference_block(params, x, kernel=kernel, stride=stride)
        n, cout = x.shape[0], int(params["w1"].shape[-1])
        assert out.shape == (n, cout) + out_hw, (name, out.shape)
        assert bool(jnp.all(jnp.isfinite(out))), name
        diff = float(jnp.max(jnp.abs(out - ref)))
        scale = float(jnp.max(jnp.abs(ref))) + 1e-6
        assert diff < 5e-2 and diff / scale < 1e-2, (name, diff, scale)

    # Config A: c_in=4 -> c_out=8, kernel=3, stride=2  (projection shortcut)
    pA = {}
    pA["w1"], pA["b1"] = _make_conv_bn_params(keys[0], 3, 4, 8)
    pA["w2"], pA["b2"] = _make_conv_bn_params(keys[1], 3, 8, 8)
    pA["wsc"], pA["bsc"] = _make_conv_bn_params(keys[2], 1, 4, 8)
    xA = jax.random.normal(keys[3], (2, 4, 16, 16), jnp.float32)
    check("A", pA, xA, 3, 2, (8, 8))

    # Config B: c_in=c_out=8, kernel=3, stride=1  (identity shortcut, exact f32 residual)
    pB = {}
    pB["w1"], pB["b1"] = _make_conv_bn_params(keys[4], 3, 8, 8)
    pB["w2"], pB["b2"] = _make_conv_bn_params(keys[5], 3, 8, 8)
    xB = jax.random.normal(keys[6], (2, 8, 16, 16), jnp.float32)
    check("B", pB, xB, 3, 1, (16, 16))

    # Config C: non-square spatial, c_in=4 -> c_out=8, kernel=3, stride=2
    pC = {}
    pC["w1"], pC["b1"] = _make_conv_bn_params(keys[7], 3, 4, 8)
    pC["w2"], pC["b2"] = _make_conv_bn_params(keys[8], 3, 8, 8)
    pC["wsc"], pC["bsc"] = _make_conv_bn_params(keys[9], 1, 4, 8)
    xC = jax.random.normal(keys[3], (2, 4, 12, 20), jnp.float32)
    check("C", pC, xC, 3, 2, (6, 10))

    print("KERNEL_OK")
</pallas_src>

<mosaic_0001>
module attributes {stable_mosaic.version = 11 : i64} {
  func.func @_residual_block_kernel(%arg0: i32, %arg1: memref<1x8x576xf32, #tpu.memory_space<vmem>>, %arg2: memref<8x72xf32, #tpu.memory_space<vmem>>, %arg3: memref<8x1xf32, #tpu.memory_space<vmem>>, %arg4: memref<8x72xf32, #tpu.memory_space<vmem>>, %arg5: memref<8x1xf32, #tpu.memory_space<vmem>>, %arg6: memref<1x120xf32, #tpu.memory_space<vmem>>, %arg7: memref<8x8xf32, #tpu.memory_space<vmem>>, %arg8: memref<1x8x128xf32, #tpu.memory_space<vmem>>, %arg9: memref<8x176xf32, #tpu.memory_space<vmem>>) attributes {dimension_semantics = [#tpu.dimension_semantics<parallel>], iteration_bounds = array<i64: 2>, scalar_prefetch = 0 : i64, scratch_operands = 1 : i64, tpu.core_type = #tpu.core_type<tc>, window_params = [{transform_indices = @transform_0, window_bounds = array<i64: 1, 8, 576>}, {pipeline_mode = #tpu.pipeline_mode<synchronous>, transform_indices = @transform_1, window_bounds = array<i64: 8, 72>}, {pipeline_mode = #tpu.pipeline_mode<synchronous>, transform_indices = @transform_2, window_bounds = array<i64: 8, 1>}, {pipeline_mode = #tpu.pipeline_mode<synchronous>, transform_indices = @transform_3, window_bounds = array<i64: 8, 72>}, {pipeline_mode = #tpu.pipeline_mode<synchronous>, transform_indices = @transform_4, window_bounds = array<i64: 8, 1>}, {pipeline_mode = #tpu.pipeline_mode<synchronous>, transform_indices = @transform_5, window_bounds = array<i64: 1, 120>}, {pipeline_mode = #tpu.pipeline_mode<synchronous>, transform_indices = @transform_6, window_bounds = array<i64: 8, 8>}, {transform_indices = @transform_7, window_bounds = array<i64: 1, 8, 128>}]} {
    %c0 = arith.constant 0 : index
    %c0_0 = arith.constant 0 : index
    %c0_1 = arith.constant 0 : index
    %0 = vector.load %arg1[%c0, %c0_0, %c0_1] : memref<1x8x576xf32, #tpu.memory_space<vmem>>, vector<1x8x120xf32>
    %1 = vector.shape_cast %0 : vector<1x8x120xf32> to vector<8x120xf32>
    %c0_2 = arith.constant 0 : index
    %c0_3 = arith.constant 0 : index
    %c144 = arith.constant 144 : index
    %2 = vector.load %arg1[%c0_2, %c0_3, %c144] : memref<1x8x576xf32, #tpu.memory_space<vmem>>, vector<1x8x120xf32>
    %3 = vector.shape_cast %2 : vector<1x8x120xf32> to vector<8x120xf32>
    %c0_4 = arith.constant 0 : index
    %c0_5 = arith.constant 0 : index
    %c1 = arith.constant 1 : index
    %4 = vector.load %arg1[%c0_4, %c0_5, %c1] : memref<1x8x576xf32, #tpu.memory_space<vmem>>, vector<1x8x120xf32>
    %5 = vector.shape_cast %4 : vector<1x8x120xf32> to vector<8x120xf32>
    %c0_6 = arith.constant 0 : index
    %c0_7 = arith.constant 0 : index
    %c288 = arith.constant 288 : index
    %6 = vector.load %arg1[%c0_6, %c0_7, %c288] : memref<1x8x576xf32, #tpu.memory_space<vmem>>, vector<1x8x120xf32>
    %7 = vector.shape_cast %6 : vector<1x8x120xf32> to vector<8x120xf32>
    %c0_8 = arith.constant 0 : index
    %c0_9 = arith.constant 0 : index
    %c432 = arith.constant 432 : index
    %8 = vector.load %arg1[%c0_8, %c0_9, %c432] : memref<1x8x576xf32, #tpu.memory_space<vmem>>, vector<1x8x120xf32>
    %9 = vector.shape_cast %8 : vector<1x8x120xf32> to vector<8x120xf32>
    %c0_10 = arith.constant 0 : index
    %c0_11 = arith.constant 0 : index
    %c289 = arith.constant 289 : index
    %10 = vector.load %arg1[%c0_10, %c0_11, %c289] : memref<1x8x576xf32, #tpu.memory_space<vmem>>, vector<1x8x120xf32>
    %11 = vector.shape_cast %10 : vector<1x8x120xf32> to vector<8x120xf32>
    %c0_12 = arith.constant 0 : index
    %c0_13 = arith.constant 0 : index
    %c16 = arith.constant 16 : index
    %12 = vector.load %arg1[%c0_12, %c0_13, %c16] : memref<1x8x576xf32, #tpu.memory_space<vmem>>, vector<1x8x120xf32>
    %13 = vector.shape_cast %12 : vector<1x8x120xf32> to vector<8x120xf32>
    %c0_14 = arith.constant 0 : index
    %c0_15 = arith.constant 0 : index
    %c160 = arith.constant 160 : index
    %14 = vector.load %arg1[%c0_14, %c0_15, %c160] : memref<1x8x576xf32, #tpu.memory_space<vmem>>, vector<1x8x120xf32>
    %15 = vector.shape_cast %14 : vector<1x8x120xf32> to vector<8x120xf32>
    %c0_16 = arith.constant 0 : index
    %c0_17 = arith.constant 0 : index
    %c17 = arith.constant 17 : index
    %16 = vector.load %arg1[%c0_16, %c0_17, %c17] : memref<1x8x576xf32, #tpu.memory_space<vmem>>, vector<1x8x120xf32>
    %17 = vector.shape_cast %16 : vector<1x8x120xf32> to vector<8x120xf32>
    %18 = tpu.concatenate %1, %3, %5, %7, %9, %11, %13, %15, %17 in 0 : vector<8x120xf32>, vector<8x120xf32>, vector<8x120xf32>, vector<8x120xf32>, vector<8x120xf32>, vector<8x120xf32>, vector<8x120xf32>, vector<8x120xf32>, vector<8x120xf32> -> vector<72x120xf32>
    %c0_18 = arith.constant 0 : index
    %c0_19 = arith.constant 0 : index
    %19 = vector.load %arg2[%c0_18, %c0_19] : memref<8x72xf32, #tpu.memory_space<vmem>>, vector<8x72xf32>
    %cst = arith.constant dense<0.000000e+00> : vector<8x120xf32>
    %20 = tpu.matmul %19, %18, %cst {dimension_numbers = #tpu.dot_dimension_numbers<[1], [0], [0], [1], [0, 0, 1, 1], [], []>} : vector<8x72xf32>, vector<72x120xf32>, vector<8x120xf32> -> vector<8x120xf32>
    %c0_20 = arith.constant 0 : index
    %c0_21 = arith.constant 0 : index
    %21 = vector.load %arg3[%c0_20, %c0_21] : memref<8x1xf32, #tpu.memory_space<vmem>>, vector<8x1xf32>
    %22 = vector.broadcast %21 : vector<8x1xf32> to vector<8x120xf32>
    %23 = arith.addf %20, %22 : vector<8x120xf32>
    %cst_22 = arith.constant 0.000000e+00 : f32
    %24 = vector.broadcast %cst_22 : f32 to vector<8x120xf32>
    %25 = arith.maximumf %23, %24 : vector<8x120xf32>
    %c0_23 = arith.constant 0 : index
    %c0_24 = arith.constant 0 : index
    %26 = vector.load %arg6[%c0_23, %c0_24] : memref<1x120xf32, #tpu.memory_space<vmem>>, vector<1x120xf32>
    %27 = vector.broadcast %26 : vector<1x120xf32> to vector<8x120xf32>
    %28 = arith.mulf %25, %27 : vector<8x120xf32>
    %cst_25 = arith.constant 0.000000e+00 : f32
    %29 = vector.broadcast %cst_25 : f32 to vector<8x176xf32>
    %c0_26 = arith.constant 0 : index
    %c0_27 = arith.constant 0 : index
    %30 = vector.load %arg9[%c0_26, %c0_27] : memref<8x176xf32, #tpu.memory_space<vmem>>, vector<8x176xf32>
    tpu.vector_store %arg9[%c0_26, %c0_27], %29 {strides = array<i32>} : memref<8x176xf32, #tpu.memory_space<vmem>>, vector<8x176xf32>,
    %c0_28 = arith.constant 0 : index
    %c17_29 = arith.constant 17 : index
    %31 = vector.load %arg9[%c0_28, %c17_29] : memref<8x176xf32, #tpu.memory_space<vmem>>, vector<8x120xf32>
    tpu.vector_store %arg9[%c0_28, %c17_29], %28 {strides = array<i32>} : memref<8x176xf32, #tpu.memory_space<vmem>>, vector<8x120xf32>,
    %c0_30 = arith.constant 0 : index
    %c0_31 = arith.constant 0 : index
    %32 = vector.load %arg9[%c0_30, %c0_31] : memref<8x176xf32, #tpu.memory_space<vmem>>, vector<8x128xf32>
    %c0_32 = arith.constant 0 : index
    %c1_33 = arith.constant 1 : index
    %33 = vector.load %arg9[%c0_32, %c1_33] : memref<8x176xf32, #tpu.memory_space<vmem>>, vector<8x128xf32>
    %c0_34 = arith.constant 0 : index
    %c2 = arith.constant 2 : index
    %34 = vector.load %arg9[%c0_34, %c2] : memref<8x176xf32, #tpu.memory_space<vmem>>, vector<8x128xf32>
    %c0_35 = arith.constant 0 : index
    %c16_36 = arith.constant 16 : index
    %35 = vector.load %arg9[%c0_35, %c16_36] : memref<8x176xf32, #tpu.memory_space<vmem>>, vector<8x128xf32>
    %c0_37 = arith.constant 0 : index
    %c17_38 = arith.constant 17 : index
    %36 = vector.load %arg9[%c0_37, %c17_38] : memref<8x176xf32, #tpu.memory_space<vmem>>, vector<8x128xf32>
    %c0_39 = arith.constant 0 : index
    %c18 = arith.constant 18 : index
    %37 = vector.load %arg9[%c0_39, %c18] : memref<8x176xf32, #tpu.memory_space<vmem>>, vector<8x128xf32>
    %c0_40 = arith.constant 0 : index
    %c32 = arith.constant 32 : index
    %38 = vector.load %arg9[%c0_40, %c32] : memref<8x176xf32, #tpu.memory_space<vmem>>, vector<8x128xf32>
    %c0_41 = arith.constant 0 : index
    %c33 = arith.constant 33 : index
    %39 = vector.load %arg9[%c0_41, %c33] : memref<8x176xf32, #tpu.memory_space<vmem>>, vector<8x128xf32>
    %c0_42 = arith.constant 0 : index
    %c34 = arith.constant 34 : index
    %40 = vector.load %arg9[%c0_42, %c34] : memref<8x176xf32, #tpu.memory_space<vmem>>, vector<8x128xf32>
    %41 = tpu.concatenate %32, %33, %34, %35, %36, %37, %38, %39, %40 in 0 : vector<8x128xf32>, vector<8x128xf32>, vector<8x128xf32>, vector<8x128xf32>, vector<8x128xf32>, vector<8x128xf32>, vector<8x128xf32>, vector<8x128xf32>, vector<8x128xf32> -> vector<72x128xf32>
    %c0_43 = arith.constant 0 : index
    %c0_44 = arith.constant 0 : index
    %42 = vector.load %arg4[%c0_43, %c0_44] : memref<8x72xf32, #tpu.memory_space<vmem>>, vector<8x72xf32>
    %cst_45 = arith.constant dense<0.000000e+00> : vector<8x128xf32>
    %43 = tpu.matmul %42, %41, %cst_45 {dimension_numbers = #tpu.dot_dimension_numbers<[1], [0], [0], [1], [0, 0, 1, 1], [], []>} : vector<8x72xf32>, vector<72x128xf32>, vector<8x128xf32> -> vector<8x128xf32>
    %c0_46 = arith.constant 0 : index
    %c0_47 = arith.constant 0 : index
    %44 = vector.load %arg5[%c0_46, %c0_47] : memref<8x1xf32, #tpu.memory_space<vmem>>, vector<8x1xf32>
    %45 = vector.broadcast %44 : vector<8x1xf32> to vector<8x128xf32>
    %46 = arith.addf %43, %45 : vector<8x128xf32>
    %c0_48 = arith.constant 0 : index
    %c0_49 = arith.constant 0 : index
    %c432_50 = arith.constant 432 : index
    %47 = vector.load %arg1[%c0_48, %c0_49, %c432_50] : memref<1x8x576xf32, #tpu.memory_space<vmem>>, vector<1x8x128xf32>
    %48 = vector.shape_cast %47 : vector<1x8x128xf32> to vector<8x128xf32>
    %c0_51 = arith.constant 0 : index
    %c0_52 = arith.constant 0 : index
    %49 = vector.load %arg7[%c0_51, %c0_52] : memref<8x8xf32, #tpu.memory_space<vmem>>, vector<8x8xf32>
    %cst_53 = arith.constant dense<0.000000e+00> : vector<8x128xf32>
    %50 = tpu.matmul %49, %48, %cst_53 {dimension_numbers = #tpu.dot_dimension_numbers<[1], [0], [0], [1], [0, 0, 1, 1], [], []>} : vector<8x8xf32>, vector<8x128xf32>, vector<8x128xf32> -> vector<8x128xf32>
    %51 = arith.addf %46, %50 : vector<8x128xf32>
    %cst_54 = arith.constant 0.000000e+00 : f32
    %52 = vector.broadcast %cst_54 : f32 to vector<8x128xf32>
    %53 = arith.maximumf %51, %52 : vector<8x128xf32>
    %c0_55 = arith.constant 0 : index
    %c0_56 = arith.constant 0 : index
    %c0_57 = arith.constant 0 : index
    %54 = vector.load %arg8[%c0_55, %c0_56, %c0_57] : memref<1x8x128xf32, #tpu.memory_space<vmem>>, vector<1x8x128xf32>
    %55 = vector.shape_cast %54 : vector<1x8x128xf32> to vector<8x128xf32>
    %56 = vector.shape_cast %53 : vector<8x128xf32> to vector<1x8x128xf32>
    tpu.vector_store %arg8[%c0_55, %c0_56, %c0_57], %56 {strides = array<i32>} : memref<1x8x128xf32, #tpu.memory_space<vmem>>, vector<1x8x128xf32>,
    return
  }
  func.func @transform_0(%arg0: i32) -> (i32, i32, i32) {
    %c0_i32 = arith.constant 0 : i32
    %c0_i32_0 = arith.constant 0 : i32
    %c0_i32_1 = arith.constant 0 : i32
    return %arg0, %c0_i32, %c0_i32_0 : i32, i32, i32
  }
  func.func @transform_1(%arg0: i32) -> (i32, i32) {
    %c0_i32 = arith.constant 0 : i32
    %c0_i32_0 = arith.constant 0 : i32
    %c0_i32_1 = arith.constant 0 : i32
    return %c0_i32, %c0_i32_0 : i32, i32
  }
  func.func @transform_2(%arg0: i32) -> (i32, i32) {
    %c0_i32 = arith.constant 0 : i32
    %c0_i32_0 = arith.constant 0 : i32
    %c0_i32_1 = arith.constant 0 : i32
    return %c0_i32, %c0_i32_0 : i32, i32
  }
  func.func @transform_3(%arg0: i32) -> (i32, i32) {
    %c0_i32 = arith.constant 0 : i32
    %c0_i32_0 = arith.constant 0 : i32
    %c0_i32_1 = arith.constant 0 : i32
    return %c0_i32, %c0_i32_0 : i32, i32
  }
  func.func @transform_4(%arg0: i32) -> (i32, i32) {
    %c0_i32 = arith.constant 0 : i32
    %c0_i32_0 = arith.constant 0 : i32
    %c0_i32_1 = arith.constant 0 : i32
    return %c0_i32, %c0_i32_0 : i32, i32
  }
  func.func @transform_5(%arg0: i32) -> (i32, i32) {
    %c0_i32 = arith.constant 0 : i32
    %c0_i32_0 = arith.constant 0 : i32
    %c0_i32_1 = arith.constant 0 : i32
    return %c0_i32, %c0_i32_0 : i32, i32
  }
  func.func @transform_6(%arg0: i32) -> (i32, i32) {
    %c0_i32 = arith.constant 0 : i32
    %c0_i32_0 = arith.constant 0 : i32
    %c0_i32_1 = arith.constant 0 : i32
    return %c0_i32, %c0_i32_0 : i32, i32
  }
  func.func @transform_7(%arg0: i32) -> (i32, i32, i32) {
    %c0_i32 = arith.constant 0 : i32
    %c0_i32_0 = arith.constant 0 : i32
    %c0_i32_1 = arith.constant 0 : i32
    return %arg0, %c0_i32, %c0_i32_0 : i32, i32, i32
  }
}

</mosaic_0001>

<llo_original>
// kernel: flexible_residual_block_forward.1
$region0: #{flexible_residual_block_forward.1}
  #allocation0 [shape = 'u32[]', space=smem, size = 0x4, offset = 0x4, fixed_abs, tag = 'smem constant byte address 0x4 - core index']
  #allocation1 [shape = 'u32[144,128]{1,0:T(1,128)}', space=vmem, size = 0x12000, scoped, tag = 'internal scratch']
  #allocation2 [shape = 'f32[8,176]{1,0:T(8,128)}', space=vmem, size = 0x2000, scoped, tag = 'scratch operand']
  %s0 = inlined_call_operand.vmem [shape: f32[2,8,576], index: 0, kind: input, shape index: {}]
  %s1 = inlined_call_operand.vmem [shape: f32[8,72], index: 1, kind: input, shape index: {}]
  %s2 = inlined_call_operand.vmem [shape: f32[8,1], index: 2, kind: input, shape index: {}]
  %s3 = inlined_call_operand.vmem [shape: f32[8,72], index: 3, kind: input, shape index: {}]
  %s4 = inlined_call_operand.vmem [shape: f32[8,1], index: 4, kind: input, shape index: {}]
  %s5 = inlined_call_operand.vmem [shape: f32[1,120], index: 5, kind: input, shape index: {}]
  %s6 = inlined_call_operand.vmem [shape: f32[8,8], index: 6, kind: input, shape index: {}]
  %s7 = inlined_call_operand.vmem [shape: f32[2,8,128], index: 7, kind: output, shape index: {}]
  %s8 = sld [smem:[#allocation0]]
  $region61: #{flexible_residual_block_forward.1} parent=0
    _
  %s10 = ssub.s32 1, %s8
  %s11 = scalar_select 0, %s10, %s8
  loop: start=0, step=1, limit=4
  $region2: #{flexible_residual_block_forward.1} parent=0 // loop_pre_header
    _
  $region3: #{flexible_residual_block_forward.1} parent=0 // loop_header
    %s13 = sphi 0, %s17
    %p14 = scmp.ge.s32.totalorder %s13, 4
    %s23 = sphi 0, %s25
    %s26 = sphi 0, %s23
    %s27 = sphi 0, %s26
    %s43 = sphi 0, %s27
    %s47 = sphi 0, %s47
    %s49 = sphi 0, %s47
    %s50 = sphi 0, %s49
    %s64 = sphi 0, %s50
    %s68 = sphi 0, %s68
    %s70 = sphi 0, %s68
    %s71 = sphi 0, %s70
    %s85 = sphi 0, %s71
    %s89 = sphi 0, %s89
    %s91 = sphi 0, %s89
    %s92 = sphi 0, %s91
    %s106 = sphi 0, %s92
    %s110 = sphi 0, %s110
    %s112 = sphi 0, %s110
    %s113 = sphi 0, %s112
    %s127 = sphi 0, %s113
    %s131 = sphi 0, %s131
    %s133 = sphi 0, %s131
    %s134 = sphi 0, %s133
    %s148 = sphi 0, %s134
    %s152 = sphi 0, %s152
    %s154 = sphi 0, %s152
    %s155 = sphi 0, %s154
    %s169 = sphi 0, %s155
    %s175 = sphi 0, %s177
    %s178 = sphi 0, %s175
    %s179 = sphi 0, %s178
    %s195 = sphi 0, %s179
  $region4: #{flexible_residual_block_forward.1} parent=0 // loop_header_branch
    %16 = sbr.rel (%p14) target = $region8
  $region5: #{flexible_residual_block_forward.1} parent=0 // loop_body
    %s18 = ssub.s32 %s13, 1
    %s19 = ssub.s32 %s13, 2
    %s20 = sadd.s32 %s13, 1
    %s21 = ssub.s32 %s13, %s20
    %p22 = scmp.eq.s32.totalorder %s21, 0
    %s24 = sadd.s32 %s23, 1
    %s25 = scalar_select %p22, %s23, %s24
    %p28 = pneg %p22
    %p29 = scmp.eq.s32.totalorder %s13, 1
    %p30 = por %p28, %p29
    %p31 = scmp.ne.s32.totalorder %s23, %s26
    %p32 = scmp.eq.s32.totalorder %s13, 0
    %p33 = por %p31, %p32
    %p34 = scmp.ne.s32.totalorder %s23, %s26
    %p35 = scmp.eq.s32.totalorder %s18, 1
    %p36 = por %p34, %p35
    %p37 = scmp.ne.s32.totalorder %s26, %s27
    %p38 = scmp.eq.s32.totalorder %s18, 0
    %p39 = por %p37, %p38
    %p40 = scmp.ne.s32.totalorder %s26, %s27
    %p41 = scmp.eq.s32.totalorder %s19, 1
    %p42 = por %p40, %p41
    %p44 = scmp.ne.s32.totalorder %s27, %s43
    %p45 = scmp.eq.s32.totalorder %s19, 0
    %p46 = por %p44, %p45
    %s48 = sadd.s32 %s47, 1
    %p51 = scmp.eq.s32.totalorder %s13, 1
    %p52 = scmp.ne.s32.totalorder %s47, %s49
    %p53 = scmp.eq.s32.totalorder %s13, 0
    %p54 = por %p52, %p53
    %p55 = scmp.ne.s32.totalorder %s47, %s49
    %p56 = scmp.eq.s32.totalorder %s18, 1
    %p57 = por %p55, %p56
    %p58 = scmp.ne.s32.totalorder %s49, %s50
    %p59 = scmp.eq.s32.totalorder %s18, 0
    %p60 = por %p58, %p59
    %p61 = scmp.ne.s32.totalorder %s49, %s50
    %p62 = scmp.eq.s32.totalorder %s19, 1
    %p63 = por %p61, %p62
    %p65 = scmp.ne.s32.totalorder %s50, %s64
    %p66 = scmp.eq.s32.totalorder %s19, 0
    %p67 = por %p65, %p66
    %s69 = sadd.s32 %s68, 1
    %p72 = scmp.eq.s32.totalorder %s13, 1
    %p73 = scmp.ne.s32.totalorder %s68, %s70
    %p74 = scmp.eq.s32.totalorder %s13, 0
    %p75 = por %p73, %p74
    %p76 = scmp.ne.s32.totalorder %s68, %s70
    %p77 = scmp.eq.s32.totalorder %s18, 1
    %p78 = por %p76, %p77
    %p79 = scmp.ne.s32.totalorder %s70, %s71
    %p80 = scmp.eq.s32.totalorder %s18, 0
    %p81 = por %p79, %p80
    %p82 = scmp.ne.s32.totalorder %s70, %s71
    %p83 = scmp.eq.s32.totalorder %s19, 1
    %p84 = por %p82, %p83
    %p86 = scmp.ne.s32.totalorder %s71, %s85
    %p87 = scmp.eq.s32.totalorder %s19, 0
    %p88 = por %p86, %p87
    %s90 = sadd.s32 %s89, 1
    %p93 = scmp.eq.s32.totalorder %s13, 1
    %p94 = scmp.ne.s32.totalorder %s89, %s91
    %p95 = scmp.eq.s32.totalorder %s13, 0
    %p96 = por %p94, %p95
    %p97 = scmp.ne.s32.totalorder %s89, %s91
    %p98 = scmp.eq.s32.totalorder %s18, 1
    %p99 = por %p97, %p98
    %p100 = scmp.ne.s32.totalorder %s91, %s92
    %p101 = scmp.eq.s32.totalorder %s18, 0
    %p102 = por %p100, %p101
    %p103 = scmp.ne.s32.totalorder %s91, %s92
    %p104 = scmp.eq.s32.totalorder %s19, 1
    %p105 = por %p103, %p104
    %p107 = scmp.ne.s32.totalorder %s92, %s106
    %p108 = scmp.eq.s32.totalorder %s19, 0
    %p109 = por %p107, %p108
    %s111 = sadd.s32 %s110, 1
    %p114 = scmp.eq.s32.totalorder %s13, 1
    %p115 = scmp.ne.s32.totalorder %s110, %s112
    %p116 = scmp.eq.s32.totalorder %s13, 0
    %p117 = por %p115, %p116
    %p118 = scmp.ne.s32.totalorder %s110, %s112
    %p119 = scmp.eq.s32.totalorder %s18, 1
    %p120 = por %p118, %p119
    %p121 = scmp.ne.s32.totalorder %s112, %s113
    %p122 = scmp.eq.s32.totalorder %s18, 0
    %p123 = por %p121, %p122
    %p124 = scmp.ne.s32.totalorder %s112, %s113
    %p125 = scmp.eq.s32.totalorder %s19, 1
    %p126 = por %p124, %p125
    %p128 = scmp.ne.s32.totalorder %s113, %s127
    %p129 = scmp.eq.s32.totalorder %s19, 0
    %p130 = por %p128, %p129
    %s132 = sadd.s32 %s131, 1
    %p135 = scmp.eq.s32.totalorder %s13, 1
    %p136 = scmp.ne.s32.totalorder %s131, %s133
    %p137 = scmp.eq.s32.totalorder %s13, 0
    %p138 = por %p136, %p137
    %p139 = scmp.ne.s32.totalorder %s131, %s133
    %p140 = scmp.eq.s32.totalorder %s18, 1
    %p141 = por %p139, %p140
    %p142 = scmp.ne.s32.totalorder %s133, %s134
    %p143 = scmp.eq.s32.totalorder %s18, 0
    %p144 = por %p142, %p143
    %p145 = scmp.ne.s32.totalorder %s133, %s134
    %p146 = scmp.eq.s32.totalorder %s19, 1
    %p147 = por %p145, %p146
    %p149 = scmp.ne.s32.totalorder %s134, %s148
    %p150 = scmp.eq.s32.totalorder %s19, 0
    %p151 = por %p149, %p150
    %s153 = sadd.s32 %s152, 1
    %p156 = scmp.eq.s32.totalorder %s13, 1
    %p157 = scmp.ne.s32.totalorder %s152, %s154
    %p158 = scmp.eq.s32.totalorder %s13, 0
    %p159 = por %p157, %p158
    %p160 = scmp.ne.s32.totalorder %s152, %s154
    %p161 = scmp.eq.s32.totalorder %s18, 1
    %p162 = por %p160, %p161
    %p163 = scmp.ne.s32.totalorder %s154, %s155
    %p164 = scmp.eq.s32.totalorder %s18, 0
    %p165 = por %p163, %p164
    %p166 = scmp.ne.s32.totalorder %s154, %s155
    %p167 = scmp.eq.s32.totalorder %s19, 1
    %p168 = por %p166, %p167
    %p170 = scmp.ne.s32.totalorder %s155, %s169
    %p171 = scmp.eq.s32.totalorder %s19, 0
    %p172 = por %p170, %p171
    %s173 = ssub.s32 %s13, %s20
    %p174 = scmp.eq.s32.totalorder %s173, 0
    %s176 = sadd.s32 %s175, 1
    %s177 = scalar_select %p174, %s175, %s176
    %p180 = pneg %p174
    %p181 = scmp.eq.s32.totalorder %s13, 1
    %p182 = por %p180, %p181
    %p183 = scmp.ne.s32.totalorder %s175, %s178
    %p184 = scmp.eq.s32.totalorder %s13, 0
    %p185 = por %p183, %p184
    %p186 = scmp.ne.s32.totalorder %s175, %s178
    %p187 = scmp.eq.s32.totalorder %s18, 1
    %p188 = por %p186, %p187
    %p189 = scmp.ne.s32.totalorder %s178, %s179
    %p190 = scmp.eq.s32.totalorder %s18, 0
    %p191 = por %p189, %p190
    %p192 = scmp.ne.s32.totalorder %s178, %s179
    %p193 = scmp.eq.s32.totalorder %s19, 1
    %p194 = por %p192, %p193
    %p196 = scmp.ne.s32.totalorder %s179, %s195
    %p197 = scmp.eq.s32.totalorder %s19, 0
    %p198 = por %p196, %p197
    %p199 = scmp.le.s32.totalorder 1, %s13
    %p200 = scmp.lt.s32.totalorder %s13, 3
    %p201 = pnand %p199, %p200
    %p202 = pneg %p201
    // Predicated region
    $region9: #{flexible_residual_block_forward.1} parent=5 // pred_check
      _
    $region10: #{flexible_residual_block_forward.1} parent=5 // pred_check_branch
      %204 = sbr.rel (%p201) target = $region12
    $region11: #{flexible_residual_block_forward.1} parent=5 // pred_region
      %s205 = ssub.s32 %s13, 1
      // Predicated region
      $region13: #{flexible_residual_block_forward.1} parent=11 // pred_check
        %p206 = pneg %p60
      $region14: #{flexible_residual_block_forward.1} parent=11 // pred_check_branch
        %208 = sbr.rel (%p206) target = $region16
      $region15: #{flexible_residual_block_forward.1} parent=11 // pred_region
        _
      $region16: #{flexible_residual_block_forward.1} parent=11 // pred_fallthru
        _
      // Predicated region
      $region17: #{flexible_residual_block_forward.1} parent=11 // pred_check
        %p209 = pneg %p81
      $region18: #{flexible_residual_block_forward.1} parent=11 // pred_check_branch
        %211 = sbr.rel (%p209) target = $region20
      $region19: #{flexible_residual_block_forward.1} parent=11 // pred_region
        _
      $region20: #{flexible_residual_block_forward.1} parent=11 // pred_fallthru
        _
      // Predicated region
      $region21: #{flexible_residual_block_forward.1} parent=11 // pred_check
        %p212 = pneg %p102
      $region22: #{flexible_residual_block_forward.1} parent=11 // pred_check_branch
        %214 = sbr.rel (%p212) target = $region24
      $region23: #{flexible_residual_block_forward.1} parent=11 // pred_region
        _
      $region24: #{flexible_residual_block_forward.1} parent=11 // pred_fallthru
        _
      // Predicated region
      $region25: #{flexible_residual_block_forward.1} parent=11 // pred_check
        %p215 = pneg %p123
      $region26: #{flexible_residual_block_forward.1} parent=11 // pred_check_branch
        %217 = sbr.rel (%p215) target = $region28
      $region27: #{flexible_residual_block_forward.1} parent=11 // pred_region
        _
      $region28: #{flexible_residual_block_forward.1} parent=11 // pred_fallthru
        _
      // Predicated region
      $region29: #{flexible_residual_block_forward.1} parent=11 // pred_check
        %p218 = pneg %p144
      $region30: #{flexible_residual_block_forward.1} parent=11 // pred_check_branch
        %220 = sbr.rel (%p218) target = $region32
      $region31: #{flexible_residual_block_forward.1} parent=11 // pred_region
        _
      $region32: #{flexible_residual_block_forward.1} parent=11 // pred_fallthru
        _
      // Predicated region
      $region33: #{flexible_residual_block_forward.1} parent=11 // pred_check
        %p221 = pneg %p165
      $region34: #{flexible_residual_block_forward.1} parent=11 // pred_check_branch
        %223 = sbr.rel (%p221) target = $region36
      $region35: #{flexible_residual_block_forward.1} parent=11 // pred_region
        _
      $region36: #{flexible_residual_block_forward.1} parent=11 // pred_fallthru
        _
    $region12: #{flexible_residual_block_forward.1} parent=5 // pred_fallthru
      _
    %p224 = scmp.lt.s32.totalorder %s13, 2
    // Predicated region
    $region37: #{flexible_residual_block_forward.1} parent=5 // pred_check
      %p225 = pneg %p224
    $region38: #{flexible_residual_block_forward.1} parent=5 // pred_check_branch
      %227 = sbr.rel (%p225) target = $region40
    $region39: #{flexible_residual_block_forward.1} parent=5 // pred_region
      // Predicated region
      $region41: #{flexible_residual_block_forward.1} parent=39 // pred_check
        %p228 = pneg %p33
      $region42: #{flexible_residual_block_forward.1} parent=39 // pred_check_branch
        %230 = sbr.rel (%p228) target = $region44
      $region43: #{flexible_residual_block_forward.1} parent=39 // pred_region
        %p231 = scmp.lt.s32.totalorder %s13, 1
        %s232 = scalar_select %p231, %s13, 1
        %s233 = smul.addr %s232, 5
        %s234 = smul.addr %s233, 8
        %s235 = scalar_lea.vmem %s0, %s234
      $region44: #{flexible_residual_block_forward.1} parent=39 // pred_fallthru
        _
    $region40: #{flexible_residual_block_forward.1} parent=5 // pred_fallthru
      _
    %p236 = scmp.le.s32.totalorder 1, %s13
    %p237 = scmp.lt.s32.totalorder %s13, 3
    %p238 = pnand %p236, %p237
    %p239 = pneg %p238
    // Predicated region
    $region45: #{flexible_residual_block_forward.1} parent=5 // pred_check
      _
    $region46: #{flexible_residual_block_forward.1} parent=5 // pred_check_branch
      %241 = sbr.rel (%p238) target = $region48
    $region47: #{flexible_residual_block_forward.1} parent=5 // pred_region
      %s242 = ssub.s32 %s13, 1
      %p243 = scmp.lt.s32.totalorder %s18, 1
      %s244 = scalar_select %p243, %s18, 1
      %s245 = smul.addr %s244, 5
      %s246 = smul.addr %s245, 8
      %s247 = scalar_lea.vmem %s0, %s246
      %p248 = pneg %p39
      %p249 = pneg %p36
      %p250 = pneg %p60
      %p251 = pneg %p57
      %p252 = pneg %p81
      %p253 = pneg %p78
      %p254 = pneg %p102
      %p255 = pneg %p99
      %p256 = pneg %p123
      %p257 = pneg %p120
      %p258 = pneg %p144
      %p259 = pneg %p141
      %p260 = pneg %p165
      %p261 = pneg %p162
      %p262 = pneg %p191
      %p263 = pneg %p188
      %p264 = scmp.lt.s32.totalorder %s18, 1
      %s265 = scalar_select %p264, %s18, 1
      %s266 = smul.addr %s265, 8
      %s267 = scalar_lea.vmem %s7, %s266
      %p268 = scmp.lt.s32.totalorder %s18, 1
      %s269 = scalar_select %p268, %s18, 1
      %s270 = smul.addr %s269, 5
      %s271 = smul.addr %s270, 8
      %s272 = scalar_lea.vmem %s0, %s271
      %p273 = scmp.lt.s32.totalorder %s18, 1
      %s274 = scalar_select %p273, %s18, 1
      %s275 = smul.addr %s274, 8
      %s276 = scalar_lea.vmem %s7, %s275
      %v277 = vld [vmem:[%s272] sm:$0xff]
      %v278 = vld [vmem:[%s272 + $0x8] sm:$0xff]
      %v279 = vld [vmem:[%s272 + $0x10] sm:$0xff]
      %v280 = vld [vmem:[%s272 + $0x18] sm:$0xff]
      %v281 = vld [vmem:[%s272 + $0x20] sm:$0xff]
      %284 = vrot.lane.b32.xlu0 %v278, 112
      %v285 = vpop.permute.xlu0 %284
      %286 = vrot.lane.b32.xlu0 %v279, 112
      %v287 = vpop.permute.xlu0 %286
      %vm288 = vcmask 916480
      %v289 = vsel %vm288, %v285, %v287
      %292 = vrot.lane.b32.xlu0 %v277, 127
      %v293 = vpop.permute.xlu0 %292
      %296 = vrot.lane.b32.xlu0 %v279, 96
      %v297 = vpop.permute.xlu0 %296
      %298 = vrot.lane.b32.xlu0 %v280, 96
      %v299 = vpop.permute.xlu0 %298
      %vm300 = vcmask 785408
      %v301 = vsel %vm300, %v297, %v299
      %304 = vrot.lane.b32.xlu0 %v280, 80
      %v305 = vpop.permute.xlu0 %304
      %306 = vrot.lane.b32.xlu0 %v281, 80
      %v307 = vpop.permute.xlu0 %306
      %vm308 = vcmask 654336
      %v309 = vsel %vm308, %v305, %v307
      %311 = vrot.lane.b32.xlu0 %v279, 95
      %v312 = vpop.permute.xlu0 %311
      %313 = vrot.lane.b32.xlu0 %v280, 95
      %v314 = vpop.permute.xlu0 %313
      %vm315 = vcmask 777216
      %v316 = vsel %vm315, %v312, %v314
      %318 = vrot.lane.b32.xlu0 %v277, 112
      %v319 = vpop.permute.xlu0 %318
      %v320 = vsel %vm288, %v319, %v285
      %322 = vrot.lane.b32.xlu0 %v278, 96
      %v323 = vpop.permute.xlu0 %322
      %v324 = vsel %vm300, %v323, %v297
      %326 = vrot.lane.b32.xlu0 %v277, 111
      %v327 = vpop.permute.xlu0 %326
      %328 = vrot.lane.b32.xlu0 %v278, 111
      %v329 = vpop.permute.xlu0 %328
      %vm330 = vcmask 908288
      %v331 = vsel %vm330, %v327, %v329
      %v333 = vld [vmem:[%s1] sm:$0xff]
      %v334 = vld [vmem:[%s2] sm:$0xff]
      %336 = vset.pattern.permute.xlu0 0
      %337 = vperm.xlu0 %336, %v334
      %v338 = vpop.permute.xlu0 %337
      %vm340 = vcmask 588800
      %v342 = vsel %vm340, %v333, 0
      %344 = vmatprep.subr.mxu0 0.0
      %345 = vmatpush1.msra.mxu0 %v277
      %346 = vmatprep.subr.mxu0 0.0
      %347 = vmatpush1.msra.mxu0 %v289
      %348 = vmatprep.subr.mxu0 0.0
      %349 = vmatpush1.msra.mxu0 %v293
      %350 = vmatprep.subr.mxu0 0.0
      %351 = vmatpush1.msra.mxu0 %v301
      %352 = vmatprep.subr.mxu0 0.0
      %353 = vmatpush1.msra.mxu0 %v309
      %354 = vmatprep.subr.mxu0 0.0
      %355 = vmatpush1.msra.mxu0 %v316
      %356 = vmatprep.subr.mxu0 0.0
      %357 = vmatpush1.msra.mxu0 %v320
      %358 = vmatprep.subr.mxu0 0.0
      %359 = vmatpush1.msra.mxu0 %v324
      %360 = vmatprep.subr.mxu0 0.0
      %361 = vmatpush1.msra.mxu0 %v331
      %362 = vmatprep.subr.mxu0 0.0
      %363 = vmatpush1.msra.mxu0 0.0
      %364 = vmatprep.subr.mxu0 0.0
      %365 = vmatpush1.msra.mxu0 0.0
      %366 = vmatprep.subr.mxu0 0.0
      %367 = vmatpush1.msra.mxu0 0.0
      %368 = vmatprep.subr.mxu0 0.0
      %369 = vmatpush1.msra.mxu0 0.0
      %370 = vmatprep.subr.mxu0 0.0
      %371 = vmatpush1.msra.mxu0 0.0
      %372 = vmatprep.subr.mxu0 0.0
      %373 = vmatpush1.msra.mxu0 0.0
      %374 = vmatprep.subr.mxu0 0.0
      %375 = vmatpush1.msra.mxu0 0.0
      %376 = vmatprep.subr.mxu0 0.0
      %377 = vmatpush1.msra.mxu0 0.0
      %378 = vmatprep.subr.mxu0 0.0
      %379 = vmatpush1.msra.mxu0 0.0
      %380 = vmatprep.subr.mxu0 0.0
      %381 = vmatpush1.msra.mxu0 0.0
      %382 = vmatprep.subr.mxu0 0.0
      %383 = vmatpush1.msra.mxu0 0.0
      %384 = vmatprep.subr.mxu0 0.0
      %385 = vmatpush1.msra.mxu0 0.0
      %386 = vmatprep.subr.mxu0 0.0
      %387 = vmatpush1.msra.mxu0 0.0
      %388 = vmatprep.subr.mxu0 0.0
      %389 = vmatpush1.msra.mxu0 0.0
      %390 = vmatprep.subr.mxu0 0.0
      %391 = vmatpush1.msra.mxu0 0.0
      %392 = vmatprep.subr.mxu0 0.0
      %393 = vmatpush1.msra.mxu0 0.0
      %394 = vmatprep.subr.mxu0 0.0
      %395 = vmatpush1.msra.mxu0 0.0
      %396 = vmatprep.subr.mxu0 0.0
      %397 = vmatpush1.msra.mxu0 0.0
      %398 = vmatprep.subr.mxu0 0.0
      %399 = vmatpush1.msra.mxu0 0.0
      %400 = vmatprep.subr.mxu0 0.0
      %401 = vmatpush1.msra.mxu0 0.0
      %402 = vmatprep.subr.mxu0 0.0
      %403 = vmatpush1.msra.mxu0 0.0
      %404 = vmatprep.subr.mxu0 0.0
      %405 = vmatpush1.msra.mxu0 0.0
      %406 = vmatprep.subr.mxu0 0.0
      %407 = vmatpush1.msra.mxu0 0.0
      %408 = vmatprep.mubr.f32.mxu0 0.0
      %409 = vmatmul.mubr.f32.gmra.mrb[0].mxu0 %v342
      %v410 = vpop.f32.mrb[0].mxu0
      %v411 = vadd.f32 %v338, %v410
      %v412 = vpop.f32.mrb[0].mxu0
      %413 = vdwg.mxu0
      %v414 = vmax.f32 %v411, 0.0
      %v415 = vld [vmem:[%s5] sm:$0x1]
      %v417 = vlaneseq
      %v418 = vshrl.u32 %v417, 7
      %v419 = vsub.s32 0, %v418
      %v420 = vrot.slane %v415, %v419
      %v422 = vmul.f32 %v414, %v420
      %423 = vst [vmem:[#allocation2] sm:$0xff] 0.0
      %vm424 = vcmask 392192
      %425 = vst.msk [vmem:[#allocation2 + $0x8] sm:$0xff] %vm424, 0.0
      %427 = vrot.lane.b32.xlu0 %v422, 17
      %v428 = vpop.permute.xlu0 %427
      %vm430 = vcmask 1047688
      %431 = vst.msk [vmem:[#allocation2] sm:$0xff] %vm430, %v428
      %vm432 = vcmask 72704
      %433 = vst.msk [vmem:[#allocation2 + $0x8] sm:$0xff] %vm432, %v428
      %v434 = vld [vmem:[#allocation2] sm:$0xff]
      %v435 = vld [vmem:[#allocation2 + $0x8] sm:$0xff]
      %438 = vrot.lane.b32.xlu0 %v434, 127
      %v439 = vpop.permute.xlu0 %438
      %440 = vrot.lane.b32.xlu0 %v435, 127
      %v441 = vpop.permute.xlu0 %440
      %vm442 = vcmask 1039360
      %v443 = vsel %vm442, %v439, %v441
      %445 = vrot.lane.b32.xlu0 %v434, 126
      %v446 = vpop.permute.xlu0 %445
      %447 = vrot.lane.b32.xlu0 %v435, 126
      %v448 = vpop.permute.xlu0 %447
      %vm449 = vcmask 1031168
      %v450 = vsel %vm449, %v446, %v448
      %452 = vrot.lane.b32.xlu0 %v434, 112
      %v453 = vpop.permute.xlu0 %452
      %454 = vrot.lane.b32.xlu0 %v435, 112
      %v455 = vpop.permute.xlu0 %454
      %v456 = vsel %vm288, %v453, %v455
      %458 = vrot.lane.b32.xlu0 %v434, 111
      %v459 = vpop.permute.xlu0 %458
      %460 = vrot.lane.b32.xlu0 %v435, 111
      %v461 = vpop.permute.xlu0 %460
      %v462 = vsel %vm330, %v459, %v461
      %464 = vrot.lane.b32.xlu0 %v434, 110
      %v465 = vpop.permute.xlu0 %464
      %466 = vrot.lane.b32.xlu0 %v435, 110
      %v467 = vpop.permute.xlu0 %466
      %vm468 = vcmask 900096
      %v469 = vsel %vm468, %v465, %v467
      %471 = vrot.lane.b32.xlu0 %v434, 96
      %v472 = vpop.permute.xlu0 %471
      %473 = vrot.lane.b32.xlu0 %v435, 96
      %v474 = vpop.permute.xlu0 %473
      %v475 = vsel %vm300, %v472, %v474
      %477 = vrot.lane.b32.xlu0 %v434, 95
      %v478 = vpop.permute.xlu0 %477
      %479 = vrot.lane.b32.xlu0 %v435, 95
      %v480 = vpop.permute.xlu0 %479
      %v481 = vsel %vm315, %v478, %v480
      %483 = vrot.lane.b32.xlu0 %v434, 94
      %v484 = vpop.permute.xlu0 %483
      %485 = vrot.lane.b32.xlu0 %v435, 94
      %v486 = vpop.permute.xlu0 %485
      %vm487 = vcmask 769024
      %v488 = vsel %vm487, %v484, %v486
      %v490 = vld [vmem:[%s3] sm:$0xff]
      %v491 = vld [vmem:[%s4] sm:$0xff]
      %493 = vset.pattern.permute.xlu0 0
      %494 = vperm.xlu0 %493, %v491
      %v495 = vpop.permute.xlu0 %494
      %v498 = vsel %vm340, %v490, 0
      %500 = vmatprep.subr.mxu0 0.0
      %501 = vmatpush1.msra.mxu0 %v434
      %502 = vmatprep.subr.mxu0 0.0
      %503 = vmatpush1.msra.mxu0 %v443
      %504 = vmatprep.subr.mxu0 0.0
      %505 = vmatpush1.msra.mxu0 %v450
      %506 = vmatprep.subr.mxu0 0.0
      %507 = vmatpush1.msra.mxu0 %v456
      %508 = vmatprep.subr.mxu0 0.0
      %509 = vmatpush1.msra.mxu0 %v462
      %510 = vmatprep.subr.mxu0 0.0
      %511 = vmatpush1.msra.mxu0 %v469
      %512 = vmatprep.subr.mxu0 0.0
      %513 = vmatpush1.msra.mxu0 %v475
      %514 = vmatprep.subr.mxu0 0.0
      %515 = vmatpush1.msra.mxu0 %v481
      %516 = vmatprep.subr.mxu0 0.0
      %517 = vmatpush1.msra.mxu0 %v488
      %518 = vmatprep.subr.mxu0 0.0
      %519 = vmatpush1.msra.mxu0 0.0
      %520 = vmatprep.subr.mxu0 0.0
      %521 = vmatpush1.msra.mxu0 0.0
      %522 = vmatprep.subr.mxu0 0.0
      %523 = vmatpush1.msra.mxu0 0.0
      %524 = vmatprep.subr.mxu0 0.0
      %525 = vmatpush1.msra.mxu0 0.0
      %526 = vmatprep.subr.mxu0 0.0
      %527 = vmatpush1.msra.mxu0 0.0
      %528 = vmatprep.subr.mxu0 0.0
      %529 = vmatpush1.msra.mxu0 0.0
      %530 = vmatprep.subr.mxu0 0.0
      %531 = vmatpush1.msra.mxu0 0.0
      %532 = vmatprep.subr.mxu0 0.0
      %533 = vmatpush1.msra.mxu0 0.0
      %534 = vmatprep.subr.mxu0 0.0
      %535 = vmatpush1.msra.mxu0 0.0
      %536 = vmatprep.subr.mxu0 0.0
      %537 = vmatpush1.msra.mxu0 0.0
      %538 = vmatprep.subr.mxu0 0.0
      %539 = vmatpush1.msra.mxu0 0.0
      %540 = vmatprep.subr.mxu0 0.0
      %541 = vmatpush1.msra.mxu0 0.0
      %542 = vmatprep.subr.mxu0 0.0
      %543 = vmatpush1.msra.mxu0 0.0
      %544 = vmatprep.subr.mxu0 0.0
      %545 = vmatpush1.msra.mxu0 0.0
      %546 = vmatprep.subr.mxu0 0.0
      %547 = vmatpush1.msra.mxu0 0.0
      %548 = vmatprep.subr.mxu0 0.0
      %549 = vmatpush1.msra.mxu0 0.0
      %550 = vmatprep.subr.mxu0 0.0
      %551 = vmatpush1.msra.mxu0 0.0
      %552 = vmatprep.subr.mxu0 0.0
      %553 = vmatpush1.msra.mxu0 0.0
      %554 = vmatprep.subr.mxu0 0.0
      %555 = vmatpush1.msra.mxu0 0.0
      %556 = vmatprep.subr.mxu0 0.0
      %557 = vmatpush1.msra.mxu0 0.0
      %558 = vmatprep.subr.mxu0 0.0
      %559 = vmatpush1.msra.mxu0 0.0
      %560 = vmatprep.subr.mxu0 0.0
      %561 = vmatpush1.msra.mxu0 0.0
      %562 = vmatprep.subr.mxu0 0.0
      %563 = vmatpush1.msra.mxu0 0.0
      %564 = vmatprep.mubr.f32.mxu0 0.0
      %565 = vmatmul.mubr.f32.gmra.mrb[0].mxu0 %v498
      %v566 = vpop.f32.mrb[0].mxu0
      %v567 = vadd.f32 %v495, %v566
      %v568 = vpop.f32.mrb[0].mxu0
      %569 = vdwg.mxu0
      %v570 = vld [vmem:[%s272 + $0x18] sm:$0xff]
      %v571 = vld [vmem:[%s272 + $0x20] sm:$0xff]
      %v572 = vld [vmem:[%s6] sm:$0xff]
      %575 = vrot.lane.b32.xlu0 %v570, 80
      %v576 = vpop.permute.xlu0 %575
      %577 = vrot.lane.b32.xlu0 %v571, 80
      %v578 = vpop.permute.xlu0 %577
      %v579 = vsel %vm308, %v576, %v578
      %vm581 = vcmask 64512
      %v583 = vsel %vm581, %v572, 0
      %585 = vmatprep.subr.mxu0 0.0
      %586 = vmatpush1.msra.mxu0 %v579
      %587 = vmatprep.subr.mxu0 0.0
      %588 = vmatpush1.msra.mxu0 0.0
      %589 = vmatprep.subr.mxu0 0.0
      %590 = vmatpush1.msra.mxu0 0.0
      %591 = vmatprep.subr.mxu0 0.0
      %592 = vmatpush1.msra.mxu0 0.0
      %593 = vmatprep.subr.mxu0 0.0
      %594 = vmatpush1.msra.mxu0 0.0
      %595 = vmatprep.subr.mxu0 0.0
      %596 = vmatpush1.msra.mxu0 0.0
      %597 = vmatprep.subr.mxu0 0.0
      %598 = vmatpush1.msra.mxu0 0.0
      %599 = vmatprep.subr.mxu0 0.0
      %600 = vmatpush1.msra.mxu0 0.0
      %601 = vmatprep.subr.mxu0 0.0
      %602 = vmatpush1.msra.mxu0 0.0
      %603 = vmatprep.subr.mxu0 0.0
      %604 = vmatpush1.msra.mxu0 0.0
      %605 = vmatprep.subr.mxu0 0.0
      %606 = vmatpush1.msra.mxu0 0.0
      %607 = vmatprep.subr.mxu0 0.0
      %608 = vmatpush1.msra.mxu0 0.0
      %609 = vmatprep.subr.mxu0 0.0
      %610 = vmatpush1.msra.mxu0 0.0
      %611 = vmatprep.subr.mxu0 0.0
      %612 = vmatpush1.msra.mxu0 0.0
      %613 = vmatprep.subr.mxu0 0.0
      %614 = vmatpush1.msra.mxu0 0.0
      %615 = vmatprep.subr.mxu0 0.0
      %616 = vmatpush1.msra.mxu0 0.0
      %617 = vmatprep.subr.mxu0 0.0
      %618 = vmatpush1.msra.mxu0 0.0
      %619 = vmatprep.subr.mxu0 0.0
      %620 = vmatpush1.msra.mxu0 0.0
      %621 = vmatprep.subr.mxu0 0.0
      %622 = vmatpush1.msra.mxu0 0.0
      %623 = vmatprep.subr.mxu0 0.0
      %624 = vmatpush1.msra.mxu0 0.0
      %625 = vmatprep.subr.mxu0 0.0
      %626 = vmatpush1.msra.mxu0 0.0
      %627 = vmatprep.subr.mxu0 0.0
      %628 = vmatpush1.msra.mxu0 0.0
      %629 = vmatprep.subr.mxu0 0.0
      %630 = vmatpush1.msra.mxu0 0.0
      %631 = vmatprep.subr.mxu0 0.0
      %632 = vmatpush1.msra.mxu0 0.0
      %633 = vmatprep.subr.mxu0 0.0
      %634 = vmatpush1.msra.mxu0 0.0
      %635 = vmatprep.subr.mxu0 0.0
      %636 = vmatpush1.msra.mxu0 0.0
      %637 = vmatprep.subr.mxu0 0.0
      %638 = vmatpush1.msra.mxu0 0.0
      %639 = vmatprep.subr.mxu0 0.0
      %640 = vmatpush1.msra.mxu0 0.0
      %641 = vmatprep.subr.mxu0 0.0
      %642 = vmatpush1.msra.mxu0 0.0
      %643 = vmatprep.subr.mxu0 0.0
      %644 = vmatpush1.msra.mxu0 0.0
      %645 = vmatprep.subr.mxu0 0.0
      %646 = vmatpush1.msra.mxu0 0.0
      %647 = vmatprep.subr.mxu0 0.0
      %648 = vmatpush1.msra.mxu0 0.0
      %649 = vmatprep.mubr.f32.mxu0 0.0
      %650 = vmatmul.mubr.f32.gmra.mrb[0].mxu0 %v583
      %v651 = vpop.f32.mrb[0].mxu0
      %v652 = vadd.f32 0.0, %v651
      %v653 = vpop.f32.mrb[0].mxu0
      %654 = vdwg.mxu0
      %v655 = vadd.f32 %v567, %v652
      %v656 = vmax.f32 %v655, 0.0
      %657 = vst [vmem:[%s276] sm:$0xff] %v656
      %p658 = scmp.lt.s32.totalorder %s18, 1
      %s659 = scalar_select %p658, %s18, 1
      %s660 = smul.addr %s659, 8
      %s661 = scalar_lea.vmem %s7, %s660
      // Predicated region
      $region49: #{flexible_residual_block_forward.1} parent=47 // pred_check
        %p662 = pneg %p188
      $region50: #{flexible_residual_block_forward.1} parent=47 // pred_check_branch
        %664 = sbr.rel (%p662) target = $region52
      $region51: #{flexible_residual_block_forward.1} parent=47 // pred_region
        _
      $region52: #{flexible_residual_block_forward.1} parent=47 // pred_fallthru
        _
    $region48: #{flexible_residual_block_forward.1} parent=5 // pred_fallthru
      _
    %p665 = scmp.le.s32.totalorder 2, %s13
    // Predicated region
    $region53: #{flexible_residual_block_forward.1} parent=5 // pred_check
      %p666 = pneg %p665
    $region54: #{flexible_residual_block_forward.1} parent=5 // pred_check_branch
      %668 = sbr.rel (%p666) target = $region56
    $region55: #{flexible_residual_block_forward.1} parent=5 // pred_region
      %s669 = ssub.s32 %s13, 2
      // Predicated region
      $region57: #{flexible_residual_block_forward.1} parent=55 // pred_check
        %p670 = pneg %p194
      $region58: #{flexible_residual_block_forward.1} parent=55 // pred_check_branch
        %672 = sbr.rel (%p670) target = $region60
      $region59: #{flexible_residual_block_forward.1} parent=55 // pred_region
        %p673 = scmp.lt.s32.totalorder %s19, 1
        %s674 = scalar_select %p673, %s19, 1
        %s675 = smul.addr %s674, 8
        %s676 = scalar_lea.vmem %s7, %s675
      $region60: #{flexible_residual_block_forward.1} parent=55 // pred_fallthru
        _
    $region56: #{flexible_residual_block_forward.1} parent=5 // pred_fallthru
      _
  $region6: #{flexible_residual_block_forward.1} parent=0 // loop_footer
    %s17 = sadd.s32 1, %s13
  $region7: #{flexible_residual_block_forward.1} parent=0 // loop_footer_branch
    %12 = sbr.rel target = $region3
  $region8: #{flexible_residual_block_forward.1} parent=0 // loop_exit
    _

</llo_original>
